<compile_context>
chip_gen: v5e
topology: v5e:2x2
jax: 0.10.0
libtpu: 0.0.40
codegen_flags: <defaults>
</compile_context>

<pallas_src>
import math

import jax
import jax.numpy as jnp
from jax.experimental import pallas as pl
from jax.experimental.pallas import tpu as pltpu

_MAX_FOLD_LANES = 4096      # bound on the folded lane width (keeps blocks small)
_FOLD_TARGET_LANES = 2048   # grow the folded lane width up to this when divisible


def _bias_add_kernel(x_ref, b_ref, o_ref):
    # x_ref: (tm, tH) tile; b_ref: (1, tH) bias row -> broadcast add on the VPU.
    o_ref[...] = x_ref[...] + b_ref[...]


def _target_block_bytes() -> int:
    """Per-block byte target: ~2 MiB sits on the roofline plateau for v5e/v6e;
    v7x's ~3.2 TB/s HBM shifts the knee right, so use ~4 MiB there."""
    try:
        kind = jax.devices()[0].device_kind.lower()
    except Exception:
        kind = ""
    if "v7" in kind or "7x" in kind:
        return 4 << 20
    return 2 << 20


def _choose_row_tile(rows: int, lane_width: int, itemsize: int,
                     target_block_bytes: int) -> int:
    """Row tile: multiple of the sublane pack, ~target-sized blocks, and capped so
    the row grid axis keeps >=2 (>=8 for large arrays) blocks for pipelining and
    v7x 2-TC 'parallel' sharding."""
    sub = max(8, 32 // itemsize)  # sublane pack: f32 -> 8, bf16 -> 16, int8/fp8 -> 32
    tm = (target_block_bytes // max(1, lane_width * itemsize)) // sub * sub
    tm = max(sub, tm)
    total_bytes = rows * lane_width * itemsize
    if total_bytes >= (1 << 20):
        want_blocks = 8 if total_bytes >= (16 << 20) else 2
        cap = (rows // want_blocks) // sub * sub
        if cap >= sub:
            tm = min(tm, cap)
    if rows <= tm:
        return rows  # full-dim block is always layout-legal
    return tm


def _pick_fold_width(N: int, H: int):
    """Lane width L for a folded (N // L, L) view, or None to keep the (R, H) view."""
    g = 128 // math.gcd(H, 128)
    base = H * g                      # lcm(H, 128): smallest lane-aligned fold width
    if base > _MAX_FOLD_LANES:
        return None                   # fold row too wide -> VMEM blow-up risk
    if H % 128 == 0 and H > 256:
        return None                   # already lane-dense and reasonably wide
    if N % base != 0:
        return None                   # not foldable as a whole (prefix split may apply)
    L = base
    while L * 2 <= _FOLD_TARGET_LANES and N % (L * 2) == 0:
        L *= 2
    return L


def _pick_lane_tile(H: int) -> int:
    """Lane-axis tile for the natural (R, H) view."""
    if H <= 8192:
        return H
    # Very wide channel dim: largest 128-multiple divisor of H <= 2048 gives exact,
    # unmasked lane tiling and long contiguous DMA runs.
    for t in range(2048, 127, -128):
        if H % t == 0:
            return t
    return 2048  # no exact divisor: only the trailing lane block is masked (rare)


def _bias_add_2d(x2d: jax.Array, bias_row: jax.Array, tm: int, tH: int,
                 *, donate: bool = False) -> jax.Array:
    rows, lanes = x2d.shape
    itemsize = jnp.dtype(x2d.dtype).itemsize
    grid = (pl.cdiv(rows, tm), pl.cdiv(lanes, tH))
    # Double-buffered x + out blocks, plus the (resident) bias row.
    needed = (2 * 2 * tm * tH + 2 * tH) * itemsize
    vmem_limit = int(min(max(2 * needed, 32 << 20), 48 << 20))
    cost = pl.CostEstimate(
        flops=rows * lanes,
        transcendentals=0,
        bytes_accessed=2 * rows * lanes * itemsize + lanes * itemsize,
    )
    return pl.pallas_call(
        _bias_add_kernel,
        out_shape=jax.ShapeDtypeStruct((rows, lanes), x2d.dtype),
        grid_spec=pltpu.PrefetchScalarGridSpec(
            num_scalar_prefetch=0,
            grid=grid,
            in_specs=[
                pl.BlockSpec((tm, tH), lambda i, j: (i, j)),  # x tile
                pl.BlockSpec((1, tH), lambda i, j: (0, j)),   # bias row (resident)
            ],
            out_specs=pl.BlockSpec((tm, tH), lambda i, j: (i, j)),
        ),
        compiler_params=pltpu.CompilerParams(
            dimension_semantics=("parallel", "parallel"),
            vmem_limit_bytes=vmem_limit,
        ),
        cost_estimate=cost,
        input_output_aliases=({0: 0} if donate else {}),
    )(x2d, bias_row)


def learnable_bias_forward(x: jax.Array, bias: jax.Array, *, donate_x: bool = False) -> jax.Array:
    """x: (..., H), bias: (H,). Returns x + bias broadcast over the last dim.

    donate_x=True aliases x with the output inside the pallas_call (only use when
    the caller actually donates x, otherwise XLA inserts a protective copy)."""
    orig_shape = x.shape
    H = orig_shape[-1]
    assert bias.shape == (H,), "bias must match last (channel) dim of x"

    N = math.prod(orig_shape)
    if N == 0:
        return x  # nothing to do

    # Bias is cast to x.dtype before the add (matches a same-dtype PyTorch module).
    b = bias.astype(x.dtype)
    itemsize = jnp.dtype(x.dtype).itemsize
    block_bytes = _target_block_bytes()

    # --- 1) Whole-array lane fold: narrow H -> wide, lane-dense (rows, L) view ---
    L = _pick_fold_width(N, H)
    if L is not None:
        rows = N // L
        x2d = x.reshape(rows, L)
        bias_row = b.reshape(1, H) if L == H else jnp.tile(b, L // H).reshape(1, L)
        tm = _choose_row_tile(rows, L, itemsize, block_bytes)
        out = _bias_add_2d(x2d, bias_row, tm, L, donate=donate_x)
        return out.reshape(orig_shape)

    R = N // H
    x2d = x.reshape(R, H)

    # --- 2) Non-foldable narrow odd H: fold the divisible row prefix, tiny tail via XLA ---
    if H % 128 != 0:
        g = 128 // math.gcd(H, 128)
        base = H * g
        R_main = (R // g) * g
        if base <= _MAX_FOLD_LANES and R_main > 0:
            main = x2d[:R_main]
            rem = x2d[R_main:]                 # < g (<=128) rows: negligible
            Nm = R_main * H
            Lm = base
            while Lm * 2 <= _FOLD_TARGET_LANES and Nm % (Lm * 2) == 0:
                Lm *= 2
            rows_m = Nm // Lm
            bias_row = jnp.tile(b, Lm // H).reshape(1, Lm)
            tm = _choose_row_tile(rows_m, Lm, itemsize, block_bytes)
            main_out = _bias_add_2d(main.reshape(rows_m, Lm), bias_row, tm, Lm)
            main_out = main_out.reshape(R_main, H)
            rem_out = rem + b                  # plain XLA add on the tiny remainder
            # TODO(synk): the concat re-streams main_out once; acceptable vs. masked
            # 48-lane stores, but a scatter-into-donated-output would remove it.
            return jnp.concatenate([main_out, rem_out], axis=0).reshape(orig_shape)
        # base too wide to fold (e.g. H ~coprime with 128 and large) or too few rows:
        # fall through — the natural view is already fairly wide there.

    # --- 3) Natural (R, H) view: exact lane tiling for wide H ---
    tH = _pick_lane_tile(H)
    tm = _choose_row_tile(R, tH, itemsize, block_bytes)
    out = _bias_add_2d(x2d, b.reshape(1, H), tm, tH, donate=donate_x)
    return out.reshape(orig_shape)


if __name__ == "__main__":
    key = jax.random.PRNGKey(0)
    k0, k1, k2, k3 = jax.random.split(key, 4)

    # Shapes consistent with the module: out_chn = 32, x = (batch, seq, out_chn).
    B, S, H = 2, 8, 32
    x = jax.random.normal(k0, (B, S, H), dtype=jnp.float32)

    bias_zeros = jnp.zeros((H,), dtype=jnp.float32)              # faithful to __init__
    bias_test = jnp.arange(H, dtype=jnp.float32) * 0.01 - 0.1    # deterministic non-trivial

    out0 = jax.block_until_ready(learnable_bias_forward(x, bias_zeros))
    out1 = jax.block_until_ready(learnable_bias_forward(x, bias_test))
    assert jnp.allclose(out0, x), "zero-bias case must be identity"
    assert jnp.allclose(out1, x + bias_test[None, None, :], atol=1e-6), "bias-add mismatch"

    # Lane-aligned path (H multiple of 128, folded wider since H <= 256).
    x2 = jax.random.normal(k1, (3, 7, 256), dtype=jnp.float32)
    b2 = jnp.linspace(-1.0, 1.0, 256, dtype=jnp.float32)
    out2 = jax.block_until_ready(learnable_bias_forward(x2, b2))
    assert jnp.allclose(out2, x2 + b2, atol=1e-6), "bias-add mismatch (H=256)"

    # Non-foldable narrow odd H: prefix-fold + tiny XLA remainder (no masked-store kernel).
    x3 = jax.random.normal(k2, (3, 7, 48), dtype=jnp.float32)
    b3 = jnp.cos(jnp.arange(48, dtype=jnp.float32))
    out3 = jax.block_until_ready(learnable_bias_forward(x3, b3))
    assert jnp.allclose(out3, x3 + b3, atol=1e-6), "bias-add mismatch (H=48)"

    # Very wide H branch: exact 128-multiple lane-tile divisor (8320 -> tH=1664).
    x4 = jax.random.normal(k3, (1, 2, 8320), dtype=jnp.float32)
    b4 = jnp.sin(jnp.arange(8320, dtype=jnp.float32) * 1e-3)
    out4 = jax.block_until_ready(learnable_bias_forward(x4, b4))
    assert jnp.allclose(out4, x4 + b4, atol=1e-6), "bias-add mismatch (H=8320)"

    print("KERNEL_OK")
</pallas_src>

<mosaic_0001>
module attributes {stable_mosaic.version = 11 : i64} {
  func.func @_bias_add_kernel(%arg0: i32, %arg1: i32, %arg2: memref<1x512xf32, #tpu.memory_space<vmem>>, %arg3: memref<1x512xf32, #tpu.memory_space<vmem>>, %arg4: memref<1x512xf32, #tpu.memory_space<vmem>>) attributes {dimension_semantics = [#tpu.dimension_semantics<parallel>, #tpu.dimension_semantics<parallel>], iteration_bounds = array<i64: 1, 1>, scalar_prefetch = 0 : i64, scratch_operands = 0 : i64, tpu.core_type = #tpu.core_type<tc>, window_params = [{transform_indices = @transform_0, window_bounds = array<i64: 1, 512>}, {transform_indices = @transform_1, window_bounds = array<i64: 1, 512>}, {transform_indices = @transform_2, window_bounds = array<i64: 1, 512>}]} {
    %c0 = arith.constant 0 : index
    %c0_0 = arith.constant 0 : index
    %0 = vector.load %arg2[%c0, %c0_0] : memref<1x512xf32, #tpu.memory_space<vmem>>, vector<1x512xf32>
    %c0_1 = arith.constant 0 : index
    %c0_2 = arith.constant 0 : index
    %1 = vector.load %arg3[%c0_1, %c0_2] : memref<1x512xf32, #tpu.memory_space<vmem>>, vector<1x512xf32>
    %2 = arith.addf %0, %1 : vector<1x512xf32>
    %c0_3 = arith.constant 0 : index
    %c0_4 = arith.constant 0 : index
    %3 = vector.load %arg4[%c0_3, %c0_4] : memref<1x512xf32, #tpu.memory_space<vmem>>, vector<1x512xf32>
    tpu.vector_store %arg4[%c0_3, %c0_4], %2 {strides = array<i32>} : memref<1x512xf32, #tpu.memory_space<vmem>>, vector<1x512xf32>,
    return
  }
  func.func @transform_0(%arg0: i32, %arg1: i32) -> (i32, i32) {
    %c0_i32 = arith.constant 0 : i32
    return %arg0, %arg1 : i32, i32
  }
  func.func @transform_1(%arg0: i32, %arg1: i32) -> (i32, i32) {
    %c0_i32 = arith.constant 0 : i32
    %c0_i32_0 = arith.constant 0 : i32
    return %c0_i32, %arg1 : i32, i32
  }
  func.func @transform_2(%arg0: i32, %arg1: i32) -> (i32, i32) {
    %c0_i32 = arith.constant 0 : i32
    return %arg0, %arg1 : i32, i32
  }
}

</mosaic_0001>

<llo_original>
// kernel: tpu_custom_call.1
$region0: #{tpu_custom_call.1}
  #allocation0 [shape = 'u32[]', space=smem, size = 0x4, offset = 0x4, fixed_abs, tag = 'smem constant byte address 0x4 - core index']
  #allocation1 [shape = 'u32[72,128]{1,0:T(1,128)}', space=vmem, size = 0x9000, scoped, tag = 'internal scratch']
  %s0 = inlined_call_operand.hbm [shape: f32[1,512], index: 0, kind: input, shape index: {}]
  %s1 = inlined_call_operand.hbm [shape: f32[1,512], index: 1, kind: input, shape index: {}]
  %s2 = inlined_call_operand.hbm [shape: f32[1,512], index: 2, kind: output, shape index: {}]
  %s3 = sld [smem:[#allocation0]]
  $region26: #{tpu_custom_call.1} parent=0
    _
  %s5 = ssub.s32 1, %s3
  %s6 = scalar_select 0, %s5, %s3
  $region1: #{tpu_custom_call.1} parent=0
    #allocation2 [shape = 'u8[2048]{0}', space=vmem, size = 0x800, scoped, tag = 'input window, operand 0, single buffered']
    #allocation3 [shape = 's32[1]{0}', space=sflag, size = 0x4, scoped, tag = 'scoped memory for tpu_custom_call.1']
    #allocation4 [shape = 's32[1]{0}', space=sflag, size = 0x4, scoped, tag = 'scoped memory for tpu_custom_call.1']
    #allocation5 [shape = 'u8[2048]{0}', space=vmem, size = 0x800, scoped, tag = 'input window, operand 1, single buffered']
    #allocation6 [shape = 's32[1]{0}', space=sflag, size = 0x4, scoped, tag = 'scoped memory for tpu_custom_call.1']
    #allocation7 [shape = 'u8[2048]{0}', space=vmem, size = 0x800, scoped, tag = 'output window, operand 0, single buffered']
    %7 = vsyncpa [#allocation3], 0
    %8 = vsyncpa [#allocation6], 0
    %9 = vsyncpa [#allocation4], 0
    // Predicated region
    $region2: #{tpu_custom_call.1} parent=1 // pred_check
      _
    $region3: #{tpu_custom_call.1} parent=1 // pred_check_branch
      %11 = sbr.rel (0) target = $region5
    $region4: #{tpu_custom_call.1} parent=1 // pred_region
      %13 = vsyncadd [#allocation3], 0
      %s15 = sshll.u32 %s0, 4
      %s16 = int_to_ptr.hbm [resolvable:$true] %s15
      %s17 = sshll.u32 [#allocation2], 4
      %s18 = int_to_ptr.vmem [resolvable:$true] %s17
      %20 = dma.hbm_to_vmem [thread:$0]  %s16, 64, %s18, [#allocation3]
    $region5: #{tpu_custom_call.1} parent=1 // pred_fallthru
      _
    // Predicated region
    $region6: #{tpu_custom_call.1} parent=1 // pred_check
      _
    $region7: #{tpu_custom_call.1} parent=1 // pred_check_branch
      %22 = sbr.rel (0) target = $region9
    $region8: #{tpu_custom_call.1} parent=1 // pred_region
      %24 = vsyncadd [#allocation6], 0
      %s26 = sshll.u32 %s1, 4
      %s27 = int_to_ptr.hbm [resolvable:$true] %s26
      %s28 = sshll.u32 [#allocation5], 4
      %s29 = int_to_ptr.vmem [resolvable:$true] %s28
      %31 = dma.hbm_to_vmem [thread:$0]  %s27, 64, %s29, [#allocation6]
    $region9: #{tpu_custom_call.1} parent=1 // pred_fallthru
      _
    // Predicated region
    $region10: #{tpu_custom_call.1} parent=1 // pred_check
      _
    $region11: #{tpu_custom_call.1} parent=1 // pred_check_branch
      %33 = sbr.rel (0) target = $region13
    $region12: #{tpu_custom_call.1} parent=1 // pred_region
      %35 = dma.done [#allocation3], 64
    $region13: #{tpu_custom_call.1} parent=1 // pred_fallthru
      _
    // Predicated region
    $region14: #{tpu_custom_call.1} parent=1 // pred_check
      _
    $region15: #{tpu_custom_call.1} parent=1 // pred_check_branch
      %37 = sbr.rel (0) target = $region17
    $region16: #{tpu_custom_call.1} parent=1 // pred_region
      %39 = dma.done [#allocation6], 64
    $region17: #{tpu_custom_call.1} parent=1 // pred_fallthru
      _
    %v40 = vld [vmem:[#allocation2] sm:$0xf]
    %v41 = vld [vmem:[#allocation5] sm:$0xf]
    %v42 = vadd.f32 %v40, %v41
    %v43 = vlaneseq
    %vm44 = vcmp.ge.s32.totalorder %v43, 0
    %vm45 = vcmp.lt.s32.totalorder %v43, 512
    %vm46 = vmand %vm44, %vm45
    %47 = vst.msk [vmem:[#allocation7] sm:$0xf] %vm46, %v42
    // Predicated region
    $region18: #{tpu_custom_call.1} parent=1 // pred_check
      _
    $region19: #{tpu_custom_call.1} parent=1 // pred_check_branch
      %49 = sbr.rel (0) target = $region21
    $region20: #{tpu_custom_call.1} parent=1 // pred_region
      %51 = vsyncadd [#allocation4], 0
      %s53 = sshll.u32 [#allocation7], 4
      %s54 = int_to_ptr.vmem [resolvable:$true] %s53
      %s55 = sshll.u32 %s2, 4
      %s56 = int_to_ptr.hbm [resolvable:$true] %s55
      %58 = dma.vmem_to_hbm [thread:$0]  %s54, 64, %s56, [#allocation4]
    $region21: #{tpu_custom_call.1} parent=1 // pred_fallthru
      _
    // Predicated region
    $region22: #{tpu_custom_call.1} parent=1 // pred_check
      _
    $region23: #{tpu_custom_call.1} parent=1 // pred_check_branch
      %60 = sbr.rel (0) target = $region25
    $region24: #{tpu_custom_call.1} parent=1 // pred_region
      %62 = dma.done [#allocation4], 64
    $region25: #{tpu_custom_call.1} parent=1 // pred_fallthru
      _
    %63 = vsyncpa [#allocation3], 1
    %64 = vsyncpa [#allocation6], 1
    %65 = vsyncpa [#allocation4], 1

</llo_original>
